<compile_context>
chip_gen: v5e
topology: v5e:2x2
jax: 0.10.0
libtpu: 0.0.40
codegen_flags: <defaults>
</compile_context>

<pallas_src>
import functools

import numpy as np

import jax
import jax.numpy as jnp
from jax.experimental import pallas as pl
from jax.experimental.pallas import tpu as pltpu

FP4_MAX = 6.0      # e2m1
FP6_MAX = 28.0     # e3m2
FP8_MAX = 448.0    # e4m3
_SF_FLOOR = 1e-12


def _round_up(x, m):
    return (x + m - 1) // m * m


def _vmem_limit_bytes():
    # Generation-aware scoped-VMEM request: ~3/4 of physical VMEM, capped.
    # (v5e/v6e: 128 MiB physical -> 96 MiB; v7x: 64 MiB physical -> 48 MiB.)
    cap = 64 * 1024 * 1024
    try:
        info = pltpu.get_tpu_info()
        cap = int(getattr(info, "vmem_capacity_bytes", cap))
    except Exception:
        pass
    return max(32 * 1024 * 1024, min(cap * 3 // 4, 96 * 1024 * 1024))


def _compute_dtype():
    # bf16 VPU exists on v6e / v7x (2 elems per lane slot, halves VALU work and
    # intermediate VMEM); v5e and older have no bf16 VPU -> keep f32 there.
    try:
        kind = jax.devices()[0].device_kind.lower()
    except Exception:
        return jnp.float32
    return jnp.bfloat16 if ("v6" in kind or "v7" in kind) else jnp.float32


def _rmsnorm_quant_kernel(x_ref, w_ref, *out_refs, eps, bounds, fmt_maxes,
                          compute_dtype, fused):
    """x_ref: (tm, H) bf16; w_ref: (1, H) bf16 (grid-invariant).

    out_refs:
      fused:     (y_ref (tm, H) bf16, sf_ref (tm, 3) f32)
      not fused: (an_ref, as_ref, ao_ref, sf_ref)
    """
    sf_ref = out_refs[-1]
    rows = x_ref.shape[0]
    hidden = x_ref.shape[-1]

    # ---- RMS statistics in f32, accumulated per partition so no full-width
    # f32 copy of the tile is ever live at once (keeps tm=512 inside v7x VMEM).
    ssq = jnp.zeros((rows, 1), jnp.float32)
    for lo, hi in bounds:
        if hi > lo:
            xp = x_ref[:, lo:hi].astype(jnp.float32)
            ssq = ssq + jnp.sum(xp * xp, axis=-1, keepdims=True)
    inv_rms = jax.lax.rsqrt(ssq * jnp.float32(1.0 / hidden) + jnp.float32(eps))
    inv_rms_c = inv_rms.astype(compute_dtype)

    # ---- per-partition normalize + absmax quantize (no full `y` temporary).
    sfs = []
    for idx, ((lo, hi), fmax) in enumerate(zip(bounds, fmt_maxes)):
        if hi <= lo:   # degenerate empty partition
            sfs.append(jnp.full((rows, 1), 1.0, jnp.float32))
            continue
        part = (x_ref[:, lo:hi].astype(compute_dtype) * inv_rms_c
                * w_ref[:, lo:hi].astype(compute_dtype))
        absmax = jnp.max(jnp.abs(part), axis=-1, keepdims=True).astype(jnp.float32)
        sf = jnp.maximum(absmax * jnp.float32(1.0 / fmax), jnp.float32(_SF_FLOOR))
        # approx reciprocal -> EUP slot (free in this DMA-bound loop); the
        # ~2^-12 relative error vs. the exact stored SF is below bf16 output
        # precision.
        inv_sf = pl.reciprocal(sf, approx=True).astype(compute_dtype)
        q = jnp.clip(part * inv_sf, -fmax, fmax)
        if fused:
            out_refs[0][:, lo:hi] = q.astype(out_refs[0].dtype)
        else:
            out_refs[idx][...] = q.astype(out_refs[idx].dtype)
        sfs.append(sf)

    # One fused (rows, 3) scale-factor store instead of three 1-lane stores.
    sf_ref[...] = jnp.concatenate(sfs, axis=1)


def llama_rmsnorm_quantize(hidden_states, weight, reorder_index,
                           eps, p4_num, p6_num, p8_num, *, tm=512,
                           assume_identity_reorder=None):
    """Mirrors LlamaRMSNorm.forward: returns (AN, AS, AO, SFAN, SFAS, SFAO, bsz, q_len)."""
    bsz, q_len, hidden = hidden_states.shape
    assert p4_num + p6_num + p8_num == hidden
    R = bsz * q_len
    x = hidden_states.reshape(R, hidden)
    w = weight

    # --- Column reorder: identity in this module's __init__.  Decide the fast
    # path STATICALLY (numpy / explicit flag) so it survives jax.jit; a traced
    # index falls back to the (correct) gather path.
    if assume_identity_reorder is not None:
        identity = bool(assume_identity_reorder)
    elif reorder_index is None:
        identity = True
    else:
        try:
            ri_np = np.asarray(reorder_index)
            identity = bool(np.array_equal(ri_np, np.arange(hidden)))
        except Exception:          # tracer -> cannot inspect; stay correct
            identity = False
    if not identity:
        ri = jnp.asarray(reorder_index).astype(jnp.int32)
        x = jnp.take(x, ri, axis=1)
        w = jnp.take(jnp.asarray(w), ri, axis=0)
    w = jnp.asarray(w).reshape(1, hidden)

    # --- Tile size: big row tiles amortize the ~0.35 us/grid-step overhead.
    tm = max(16, min(_round_up(tm, 16), _round_up(R, 16)))
    # v7x megacore: keep a few grid steps so both TensorCores get work
    # (no-op on 1-TC chips; 256-row tiles are within ~1% of 512 anyway).
    while tm > 256 and pl.cdiv(R, tm) < 8:
        tm //= 2
    # VMEM budget (in dbuf + out dbuf + f32/bf16 temps ~12 B/element).
    vmem_limit = _vmem_limit_bytes()
    per_row_bytes = hidden * 12
    while tm > 64 and tm * per_row_bytes > (vmem_limit * 3) // 5:
        tm //= 2

    grid = (pl.cdiv(R, tm),)   # ragged tail handled by Pallas masking; no pad/slice copies

    compute_dtype = _compute_dtype()
    bounds = ((0, p4_num), (p4_num, p4_num + p6_num), (p4_num + p6_num, hidden))
    fmt_maxes = (FP4_MAX, FP6_MAX, FP8_MAX)

    # 128-aligned partitions -> separate lane-dense outputs (no extra copies).
    # Otherwise fuse AN|AS|AO into one lane-dense (R, hidden) slab (partitions
    # are contiguous columns) and split in the wrapper.
    aligned = all(p > 0 and p % 128 == 0 for p in (p4_num, p6_num, p8_num))
    fused = not aligned

    if fused:
        out_shape = (jax.ShapeDtypeStruct((R, hidden), jnp.bfloat16),
                     jax.ShapeDtypeStruct((R, 3), jnp.float32))
        out_specs = (pl.BlockSpec((tm, hidden), lambda i: (i, 0)),
                     pl.BlockSpec((tm, 3), lambda i: (i, 0)))
    else:
        out_shape = (jax.ShapeDtypeStruct((R, p4_num), jnp.bfloat16),
                     jax.ShapeDtypeStruct((R, p6_num), jnp.bfloat16),
                     jax.ShapeDtypeStruct((R, p8_num), jnp.bfloat16),
                     jax.ShapeDtypeStruct((R, 3), jnp.float32))
        out_specs = (pl.BlockSpec((tm, p4_num), lambda i: (i, 0)),
                     pl.BlockSpec((tm, p6_num), lambda i: (i, 0)),
                     pl.BlockSpec((tm, p8_num), lambda i: (i, 0)),
                     pl.BlockSpec((tm, 3), lambda i: (i, 0)))

    kernel = functools.partial(_rmsnorm_quant_kernel, eps=eps, bounds=bounds,
                               fmt_maxes=fmt_maxes, compute_dtype=compute_dtype,
                               fused=fused)

    outs = pl.pallas_call(
        kernel,
        out_shape=out_shape,
        grid_spec=pltpu.PrefetchScalarGridSpec(
            num_scalar_prefetch=0,
            grid=grid,
            in_specs=[
                pl.BlockSpec((tm, hidden), lambda i: (i, 0)),   # x row tile
                pl.BlockSpec((1, hidden), lambda i: (0, 0)),    # weight (resident)
            ],
            out_specs=out_specs,
        ),
        compiler_params=pltpu.CompilerParams(
            dimension_semantics=("parallel",),      # shard row axis over TCs (v7x)
            vmem_limit_bytes=vmem_limit,
        ),
    )(x, w)

    if fused:
        Y, SF = outs
        AN = Y[:, :p4_num]
        AS = Y[:, p4_num:p4_num + p6_num]
        AO = Y[:, p4_num + p6_num:]
    else:
        AN, AS, AO, SF = outs
    SFAN, SFAS, SFAO = SF[:, 0:1], SF[:, 1:2], SF[:, 2:3]
    return AN, AS, AO, SFAN, SFAS, SFAO, bsz, q_len


if __name__ == "__main__":
    # Small synthetic config consistent with the module's __init__.
    hidden_size = 32
    eps = 1e-6
    p8_num = 8
    p6_num = 8
    p4_num = hidden_size - p8_num - p6_num   # 16
    bsz, q_len = 2, 8

    key = jax.random.PRNGKey(0)
    kx, kw = jax.random.split(key)
    hidden_states = jax.random.normal(kx, (bsz, q_len, hidden_size),
                                      dtype=jnp.float32).astype(jnp.bfloat16)
    # Parameter shape from __init__: (hidden_size,) bf16 (nonzero for a
    # meaningful sanity check; the module itself inits to zeros).
    weight = (1.0 + 0.1 * jax.random.normal(kw, (hidden_size,),
                                            dtype=jnp.float32)).astype(jnp.bfloat16)
    reorder_index = np.arange(hidden_size, dtype=np.int32)  # identity, as in __init__

    outs = llama_rmsnorm_quantize(hidden_states, weight, reorder_index,
                                  eps, p4_num, p6_num, p8_num)
    AN, AS, AO, SFAN, SFAS, SFAO, out_bsz, out_qlen = outs
    jax.block_until_ready((AN, AS, AO, SFAN, SFAS, SFAO))

    assert AN.shape == (bsz * q_len, p4_num)
    assert AS.shape == (bsz * q_len, p6_num)
    assert AO.shape == (bsz * q_len, p8_num)
    assert SFAN.shape == SFAS.shape == SFAO.shape == (bsz * q_len, 1)
    assert (out_bsz, out_qlen) == (bsz, q_len)

    # Light sanity check against a pure-JAX reference of the RMSNorm + scaling
    # (loose tolerance: bf16 compute path + approx reciprocal).
    xf = hidden_states.reshape(bsz * q_len, hidden_size).astype(jnp.float32)
    wf = weight.astype(jnp.float32)
    y = xf * jax.lax.rsqrt(jnp.mean(xf * xf, -1, keepdims=True) + eps) * wf
    recon = jnp.concatenate(
        [AN.astype(jnp.float32) * SFAN,
         AS.astype(jnp.float32) * SFAS,
         AO.astype(jnp.float32) * SFAO], axis=1)
    assert jnp.max(jnp.abs(recon - y)) < 1e-1, "dequantized output mismatch"

    print("KERNEL_OK")
</pallas_src>

<mosaic_0001>
module attributes {stable_mosaic.version = 11 : i64} {
  func.func @_rmsnorm_quant_kernel(%arg0: i32, %arg1: memref<16x32xbf16, #tpu.memory_space<vmem>>, %arg2: memref<1x32xbf16, #tpu.memory_space<vmem>>, %arg3: memref<16x32xbf16, #tpu.memory_space<vmem>>, %arg4: memref<16x3xf32, #tpu.memory_space<vmem>>) attributes {dimension_semantics = [#tpu.dimension_semantics<parallel>], iteration_bounds = array<i64: 1>, scalar_prefetch = 0 : i64, scratch_operands = 0 : i64, tpu.core_type = #tpu.core_type<tc>, window_params = [{transform_indices = @transform_0, window_bounds = array<i64: 16, 32>}, {pipeline_mode = #tpu.pipeline_mode<synchronous>, transform_indices = @transform_1, window_bounds = array<i64: 1, 32>}, {transform_indices = @transform_2, window_bounds = array<i64: 16, 32>}, {transform_indices = @transform_3, window_bounds = array<i64: 16, 3>}]} {
    %cst = arith.constant 0.000000e+00 : f32
    %0 = vector.broadcast %cst : f32 to vector<16x1xf32>
    %c0 = arith.constant 0 : index
    %c0_0 = arith.constant 0 : index
    %1 = vector.load %arg1[%c0, %c0_0] : memref<16x32xbf16, #tpu.memory_space<vmem>>, vector<16x16xbf16>
    %2 = arith.extf %1 : vector<16x16xbf16> to vector<16x16xf32>
    %3 = arith.mulf %2, %2 : vector<16x16xf32>
    %cst_1 = arith.constant dense<0.000000e+00> : vector<16xf32>
    %4 = vector.multi_reduction <add>, %3, %cst_1 [1] : vector<16x16xf32> to vector<16xf32>
    %5 = vector.shape_cast %4 : vector<16xf32> to vector<16x1xf32>
    %6 = arith.addf %0, %5 : vector<16x1xf32>
    %c0_2 = arith.constant 0 : index
    %c16 = arith.constant 16 : index
    %7 = vector.load %arg1[%c0_2, %c16] : memref<16x32xbf16, #tpu.memory_space<vmem>>, vector<16x8xbf16>
    %8 = arith.extf %7 : vector<16x8xbf16> to vector<16x8xf32>
    %9 = arith.mulf %8, %8 : vector<16x8xf32>
    %cst_3 = arith.constant dense<0.000000e+00> : vector<16xf32>
    %10 = vector.multi_reduction <add>, %9, %cst_3 [1] : vector<16x8xf32> to vector<16xf32>
    %11 = vector.shape_cast %10 : vector<16xf32> to vector<16x1xf32>
    %12 = arith.addf %6, %11 : vector<16x1xf32>
    %c0_4 = arith.constant 0 : index
    %c24 = arith.constant 24 : index
    %13 = vector.load %arg1[%c0_4, %c24] : memref<16x32xbf16, #tpu.memory_space<vmem>>, vector<16x8xbf16>
    %14 = arith.extf %13 : vector<16x8xbf16> to vector<16x8xf32>
    %15 = arith.mulf %14, %14 : vector<16x8xf32>
    %cst_5 = arith.constant dense<0.000000e+00> : vector<16xf32>
    %16 = vector.multi_reduction <add>, %15, %cst_5 [1] : vector<16x8xf32> to vector<16xf32>
    %17 = vector.shape_cast %16 : vector<16xf32> to vector<16x1xf32>
    %18 = arith.addf %12, %17 : vector<16x1xf32>
    %cst_6 = arith.constant 3.125000e-02 : f32
    %19 = vector.broadcast %cst_6 : f32 to vector<16x1xf32>
    %20 = arith.mulf %18, %19 : vector<16x1xf32>
    %cst_7 = arith.constant 9.99999997E-7 : f32
    %21 = vector.broadcast %cst_7 : f32 to vector<16x1xf32>
    %22 = arith.addf %20, %21 : vector<16x1xf32>
    %23 = math.rsqrt %22 : vector<16x1xf32>
    %c0_8 = arith.constant 0 : index
    %c0_9 = arith.constant 0 : index
    %24 = vector.load %arg1[%c0_8, %c0_9] : memref<16x32xbf16, #tpu.memory_space<vmem>>, vector<16x16xbf16>
    %25 = arith.extf %24 : vector<16x16xbf16> to vector<16x16xf32>
    %26 = vector.broadcast %23 : vector<16x1xf32> to vector<16x16xf32>
    %27 = arith.mulf %25, %26 : vector<16x16xf32>
    %c0_10 = arith.constant 0 : index
    %c0_11 = arith.constant 0 : index
    %28 = vector.load %arg2[%c0_10, %c0_11] : memref<1x32xbf16, #tpu.memory_space<vmem>>, vector<1x16xbf16>
    %29 = arith.extf %28 : vector<1x16xbf16> to vector<1x16xf32>
    %30 = vector.broadcast %29 : vector<1x16xf32> to vector<16x16xf32>
    %31 = arith.mulf %27, %30 : vector<16x16xf32>
    %32 = math.absf %31 : vector<16x16xf32>
    %cst_12 = arith.constant dense<0xFF800000> : vector<16xf32>
    %33 = vector.multi_reduction <maximumf>, %32, %cst_12 [1] : vector<16x16xf32> to vector<16xf32>
    %34 = vector.shape_cast %33 : vector<16xf32> to vector<16x1xf32>
    %cst_13 = arith.constant 0.166666672 : f32
    %35 = vector.broadcast %cst_13 : f32 to vector<16x1xf32>
    %36 = arith.mulf %34, %35 : vector<16x1xf32>
    %cst_14 = arith.constant 9.99999996E-13 : f32
    %37 = vector.broadcast %cst_14 : f32 to vector<16x1xf32>
    %38 = arith.maximumf %36, %37 : vector<16x1xf32>
    %39 = tpu.reciprocal %38 {approx = true} : vector<16x1xf32> -> vector<16x1xf32>
    %40 = vector.broadcast %39 : vector<16x1xf32> to vector<16x16xf32>
    %41 = arith.mulf %31, %40 : vector<16x16xf32>
    %cst_15 = arith.constant -6.000000e+00 : f32
    %cst_16 = arith.constant 6.000000e+00 : f32
    %42 = vector.broadcast %cst_15 : f32 to vector<16x16xf32>
    %43 = arith.maximumf %42, %41 : vector<16x16xf32>
    %44 = vector.broadcast %cst_16 : f32 to vector<16x16xf32>
    %45 = arith.minimumf %44, %43 : vector<16x16xf32>
    %46 = arith.truncf %45 : vector<16x16xf32> to vector<16x16xbf16>
    %c0_17 = arith.constant 0 : index
    %c0_18 = arith.constant 0 : index
    %47 = vector.load %arg3[%c0_17, %c0_18] : memref<16x32xbf16, #tpu.memory_space<vmem>>, vector<16x16xbf16>
    tpu.vector_store %arg3[%c0_17, %c0_18], %46 {strides = array<i32>} : memref<16x32xbf16, #tpu.memory_space<vmem>>, vector<16x16xbf16>,
    %c0_19 = arith.constant 0 : index
    %c16_20 = arith.constant 16 : index
    %48 = vector.load %arg1[%c0_19, %c16_20] : memref<16x32xbf16, #tpu.memory_space<vmem>>, vector<16x8xbf16>
    %49 = arith.extf %48 : vector<16x8xbf16> to vector<16x8xf32>
    %50 = vector.broadcast %23 : vector<16x1xf32> to vector<16x8xf32>
    %51 = arith.mulf %49, %50 : vector<16x8xf32>
    %c0_21 = arith.constant 0 : index
    %c16_22 = arith.constant 16 : index
    %52 = vector.load %arg2[%c0_21, %c16_22] : memref<1x32xbf16, #tpu.memory_space<vmem>>, vector<1x8xbf16>
    %53 = arith.extf %52 : vector<1x8xbf16> to vector<1x8xf32>
    %54 = vector.broadcast %53 : vector<1x8xf32> to vector<16x8xf32>
    %55 = arith.mulf %51, %54 : vector<16x8xf32>
    %56 = math.absf %55 : vector<16x8xf32>
    %cst_23 = arith.constant dense<0xFF800000> : vector<16xf32>
    %57 = vector.multi_reduction <maximumf>, %56, %cst_23 [1] : vector<16x8xf32> to vector<16xf32>
    %58 = vector.shape_cast %57 : vector<16xf32> to vector<16x1xf32>
    %cst_24 = arith.constant 0.0357142873 : f32
    %59 = vector.broadcast %cst_24 : f32 to vector<16x1xf32>
    %60 = arith.mulf %58, %59 : vector<16x1xf32>
    %cst_25 = arith.constant 9.99999996E-13 : f32
    %61 = vector.broadcast %cst_25 : f32 to vector<16x1xf32>
    %62 = arith.maximumf %60, %61 : vector<16x1xf32>
    %63 = tpu.reciprocal %62 {approx = true} : vector<16x1xf32> -> vector<16x1xf32>
    %64 = vector.broadcast %63 : vector<16x1xf32> to vector<16x8xf32>
    %65 = arith.mulf %55, %64 : vector<16x8xf32>
    %cst_26 = arith.constant -2.800000e+01 : f32
    %cst_27 = arith.constant 2.800000e+01 : f32
    %66 = vector.broadcast %cst_26 : f32 to vector<16x8xf32>
    %67 = arith.maximumf %66, %65 : vector<16x8xf32>
    %68 = vector.broadcast %cst_27 : f32 to vector<16x8xf32>
    %69 = arith.minimumf %68, %67 : vector<16x8xf32>
    %70 = arith.truncf %69 : vector<16x8xf32> to vector<16x8xbf16>
    %c0_28 = arith.constant 0 : index
    %c16_29 = arith.constant 16 : index
    %71 = vector.load %arg3[%c0_28, %c16_29] : memref<16x32xbf16, #tpu.memory_space<vmem>>, vector<16x8xbf16>
    tpu.vector_store %arg3[%c0_28, %c16_29], %70 {strides = array<i32>} : memref<16x32xbf16, #tpu.memory_space<vmem>>, vector<16x8xbf16>,
    %c0_30 = arith.constant 0 : index
    %c24_31 = arith.constant 24 : index
    %72 = vector.load %arg1[%c0_30, %c24_31] : memref<16x32xbf16, #tpu.memory_space<vmem>>, vector<16x8xbf16>
    %73 = arith.extf %72 : vector<16x8xbf16> to vector<16x8xf32>
    %74 = vector.broadcast %23 : vector<16x1xf32> to vector<16x8xf32>
    %75 = arith.mulf %73, %74 : vector<16x8xf32>
    %c0_32 = arith.constant 0 : index
    %c24_33 = arith.constant 24 : index
    %76 = vector.load %arg2[%c0_32, %c24_33] : memref<1x32xbf16, #tpu.memory_space<vmem>>, vector<1x8xbf16>
    %77 = arith.extf %76 : vector<1x8xbf16> to vector<1x8xf32>
    %78 = vector.broadcast %77 : vector<1x8xf32> to vector<16x8xf32>
    %79 = arith.mulf %75, %78 : vector<16x8xf32>
    %80 = math.absf %79 : vector<16x8xf32>
    %cst_34 = arith.constant dense<0xFF800000> : vector<16xf32>
    %81 = vector.multi_reduction <maximumf>, %80, %cst_34 [1] : vector<16x8xf32> to vector<16xf32>
    %82 = vector.shape_cast %81 : vector<16xf32> to vector<16x1xf32>
    %cst_35 = arith.constant 0.00223214296 : f32
    %83 = vector.broadcast %cst_35 : f32 to vector<16x1xf32>
    %84 = arith.mulf %82, %83 : vector<16x1xf32>
    %cst_36 = arith.constant 9.99999996E-13 : f32
    %85 = vector.broadcast %cst_36 : f32 to vector<16x1xf32>
    %86 = arith.maximumf %84, %85 : vector<16x1xf32>
    %87 = tpu.reciprocal %86 {approx = true} : vector<16x1xf32> -> vector<16x1xf32>
    %88 = vector.broadcast %87 : vector<16x1xf32> to vector<16x8xf32>
    %89 = arith.mulf %79, %88 : vector<16x8xf32>
    %cst_37 = arith.constant -4.480000e+02 : f32
    %cst_38 = arith.constant 4.480000e+02 : f32
    %90 = vector.broadcast %cst_37 : f32 to vector<16x8xf32>
    %91 = arith.maximumf %90, %89 : vector<16x8xf32>
    %92 = vector.broadcast %cst_38 : f32 to vector<16x8xf32>
    %93 = arith.minimumf %92, %91 : vector<16x8xf32>
    %94 = arith.truncf %93 : vector<16x8xf32> to vector<16x8xbf16>
    %c0_39 = arith.constant 0 : index
    %c24_40 = arith.constant 24 : index
    %95 = vector.load %arg3[%c0_39, %c24_40] : memref<16x32xbf16, #tpu.memory_space<vmem>>, vector<16x8xbf16>
    tpu.vector_store %arg3[%c0_39, %c24_40], %94 {strides = array<i32>} : memref<16x32xbf16, #tpu.memory_space<vmem>>, vector<16x8xbf16>,
    %96 = tpu.concatenate %38, %62, %86 in 1 : vector<16x1xf32>, vector<16x1xf32>, vector<16x1xf32> -> vector<16x3xf32>
    %c0_41 = arith.constant 0 : index
    %c0_42 = arith.constant 0 : index
    %97 = vector.load %arg4[%c0_41, %c0_42] : memref<16x3xf32, #tpu.memory_space<vmem>>, vector<16x3xf32>
    tpu.vector_store %arg4[%c0_41, %c0_42], %96 {strides = array<i32>} : memref<16x3xf32, #tpu.memory_space<vmem>>, vector<16x3xf32>,
    return
  }
  func.func @transform_0(%arg0: i32) -> (i32, i32) {
    %c0_i32 = arith.constant 0 : i32
    %c0_i32_0 = arith.constant 0 : i32
    return %arg0, %c0_i32 : i32, i32
  }
  func.func @transform_1(%arg0: i32) -> (i32, i32) {
    %c0_i32 = arith.constant 0 : i32
    %c0_i32_0 = arith.constant 0 : i32
    %c0_i32_1 = arith.constant 0 : i32
    return %c0_i32, %c0_i32_0 : i32, i32
  }
  func.func @transform_2(%arg0: i32) -> (i32, i32) {
    %c0_i32 = arith.constant 0 : i32
    %c0_i32_0 = arith.constant 0 : i32
    return %arg0, %c0_i32 : i32, i32
  }
  func.func @transform_3(%arg0: i32) -> (i32, i32) {
    %c0_i32 = arith.constant 0 : i32
    %c0_i32_0 = arith.constant 0 : i32
    return %arg0, %c0_i32 : i32, i32
  }
}

</mosaic_0001>

<llo_original>
// kernel: tpu_custom_call.1
$region0: #{tpu_custom_call.1}
  #allocation0 [shape = 'u32[]', space=smem, size = 0x4, offset = 0x4, fixed_abs, tag = 'smem constant byte address 0x4 - core index']
  #allocation1 [shape = 'u32[72,128]{1,0:T(1,128)}', space=vmem, size = 0x9000, scoped, tag = 'internal scratch']
  %s0 = inlined_call_operand.hbm [shape: bf16[16,32], index: 0, kind: input, shape index: {}]
  %s1 = inlined_call_operand.hbm [shape: bf16[1,32], index: 1, kind: input, shape index: {}]
  %s2 = inlined_call_operand.hbm [shape: bf16[16,32], index: 2, kind: output, shape index: {0}]
  %s3 = inlined_call_operand.vmem [shape: f32[16,3], index: 3, kind: output, shape index: {1}]
  %4 = xla_tuple %s2, %s3
  %s5 = sld [smem:[#allocation0]]
  $region34: #{tpu_custom_call.1} parent=0
    _
  %s7 = ssub.s32 1, %s5
  %s8 = scalar_select 0, %s7, %s5
  $region1: #{tpu_custom_call.1} parent=0
    #allocation2 [shape = 'u8[4096]{0}', space=vmem, size = 0x1000, scoped, tag = 'input window, operand 0, single buffered']
    #allocation3 [shape = 's32[1]{0}', space=sflag, size = 0x4, scoped, tag = 'scoped memory for tpu_custom_call.1']
    #allocation4 [shape = 's32[1]{0}', space=sflag, size = 0x4, scoped, tag = 'scoped memory for tpu_custom_call.1']
    #allocation5 [shape = 'u8[512]{0}', space=vmem, size = 0x400, scoped, tag = 'input window, operand 1, single buffered']
    #allocation6 [shape = 's32[1]{0}', space=sflag, size = 0x4, scoped, tag = 'scoped memory for tpu_custom_call.1']
    #allocation7 [shape = 'u8[4096]{0}', space=vmem, size = 0x1000, scoped, tag = 'output window, operand 0, single buffered']
    %9 = vsyncpa [#allocation3], 0
    %10 = vsyncpa [#allocation6], 0
    %11 = vsyncpa [#allocation4], 0
    // Predicated region
    $region2: #{tpu_custom_call.1} parent=1 // pred_check
      _
    $region3: #{tpu_custom_call.1} parent=1 // pred_check_branch
      %13 = sbr.rel (0) target = $region5
    $region4: #{tpu_custom_call.1} parent=1 // pred_region
      %15 = vsyncadd [#allocation3], 0
      %s16 = sshll.u32 %s0, 4
      %s17 = int_to_ptr.hbm [resolvable:$true] %s16
      %s18 = sshll.u32 [#allocation2], 4
      %s19 = int_to_ptr.vmem [resolvable:$true] %s18
      %24 = dma.hbm_to_vmem [thread:$0]  %s17, 128, %s19, [#allocation3], 64, 64, 4
    $region5: #{tpu_custom_call.1} parent=1 // pred_fallthru
      _
    // Predicated region
    $region6: #{tpu_custom_call.1} parent=1 // pred_check
      _
    $region7: #{tpu_custom_call.1} parent=1 // pred_check_branch
      %26 = sbr.rel (0) target = $region9
    $region8: #{tpu_custom_call.1} parent=1 // pred_region
      %28 = vsyncadd [#allocation6], 0
      %s30 = sshll.u32 %s1, 4
      %s31 = int_to_ptr.hbm [resolvable:$true] %s30
      %s32 = sshll.u32 [#allocation5], 4
      %s33 = int_to_ptr.vmem [resolvable:$true] %s32
      %35 = dma.hbm_to_vmem [thread:$0]  %s31, 16, %s33, [#allocation6]
    $region9: #{tpu_custom_call.1} parent=1 // pred_fallthru
      _
    // Predicated region
    $region10: #{tpu_custom_call.1} parent=1 // pred_check
      _
    $region11: #{tpu_custom_call.1} parent=1 // pred_check_branch
      %37 = sbr.rel (0) target = $region13
    $region12: #{tpu_custom_call.1} parent=1 // pred_region
      %39 = dma.done [#allocation3], 128
    $region13: #{tpu_custom_call.1} parent=1 // pred_fallthru
      _
    // Predicated region
    $region14: #{tpu_custom_call.1} parent=1 // pred_check
      _
    $region15: #{tpu_custom_call.1} parent=1 // pred_check_branch
      %41 = sbr.rel (0) target = $region17
    $region16: #{tpu_custom_call.1} parent=1 // pred_region
      %43 = dma.done [#allocation6], 16
    $region17: #{tpu_custom_call.1} parent=1 // pred_fallthru
      _
    %v44 = vld [vmem:[#allocation2] sm:$0xf]
    %v45 = vld [vmem:[#allocation2 + $0x4] sm:$0xf]
    %v46 = vunpack.c.l.bf16 %v44
    %v47 = vunpack.c.l.bf16 %v45
    %v48 = vmul.f32 %v46, %v46
    %v49 = vmul.f32 %v47, %v47
    %vm50 = vcmask 130048
    %v51 = vsel %vm50, %v48, 0.0
    %52 = vadd.xlane.f32.xlu0 %v51
    %v53 = vpop.xlane.xlu0 %52
    %v54 = vsel %vm50, %v49, 0.0
    %55 = vadd.xlane.f32.xlu0 %v54
    %v56 = vpop.xlane.xlu0 %55
    %v57 = vadd.f32 %v53, 0.0
    %v58 = vadd.f32 %v56, 0.0
    %61 = vrot.lane.b32.xlu0 %v48, 112
    %v62 = vpop.permute.xlu0 %61
    %63 = vrot.lane.b32.xlu0 %v49, 112
    %v64 = vpop.permute.xlu0 %63
    %vm67 = vcmask 64512
    %v68 = vsel %vm67, %v62, 0.0
    %69 = vadd.xlane.f32.xlu0 %v68
    %v70 = vpop.xlane.xlu0 %69
    %v71 = vsel %vm67, %v64, 0.0
    %72 = vadd.xlane.f32.xlu0 %v71
    %v73 = vpop.xlane.xlu0 %72
    %v74 = vadd.f32 %v57, %v70
    %v75 = vadd.f32 %v58, %v73
    %76 = vrot.lane.b32.xlu0 %v48, 104
    %v77 = vpop.permute.xlu0 %76
    %78 = vrot.lane.b32.xlu0 %v49, 104
    %v79 = vpop.permute.xlu0 %78
    %v82 = vsel %vm67, %v77, 0.0
    %83 = vadd.xlane.f32.xlu0 %v82
    %v84 = vpop.xlane.xlu0 %83
    %v85 = vsel %vm67, %v79, 0.0
    %86 = vadd.xlane.f32.xlu0 %v85
    %v87 = vpop.xlane.xlu0 %86
    %v88 = vadd.f32 %v74, %v84
    %v89 = vadd.f32 %v75, %v87
    %v90 = vmul.f32 %v88, 0.03125
    %v91 = vmul.f32 %v89, 0.03125
    %v92 = vadd.f32 %v90, 1e-06
    %v93 = vadd.f32 %v91, 1e-06
    %v94 = vrsqrt.pop %v92
    %v95 = vmul.f32 %v94, %v92
    %v96 = vmul.f32 %v95, %v94
    %v97 = vmul.f32 0.5, %v96
    %v98 = vsub.f32 1.5, %v97
    %v99 = vmul.f32 %v94, %v98
    %vm100 = vweird.f32 %v92
    %vm101 = vweird.f32 %v94
    %vm102 = vmor %vm100, %vm101
    %v103 = vsel %vm102, %v94, %v99
    %v104 = vrsqrt.pop %v93
    %v105 = vmul.f32 %v104, %v93
    %v106 = vmul.f32 %v105, %v104
    %v107 = vmul.f32 0.5, %v106
    %v108 = vsub.f32 1.5, %v107
    %v109 = vmul.f32 %v104, %v108
    %vm110 = vweird.f32 %v93
    %vm111 = vweird.f32 %v104
    %vm112 = vmor %vm110, %vm111
    %v113 = vsel %vm112, %v104, %v109
    %v114 = vmul.f32 %v46, %v103
    %v115 = vmul.f32 %v47, %v113
    %v116 = vld [vmem:[#allocation5] sm:$0x1]
    %v117 = vunpack.c.l.bf16 %v116
    %v118 = vperm.slane %v117, 0
    %v119 = vmul.f32 %v114, %v118
    %v120 = vmul.f32 %v115, %v118
    %v121 = vand.u32 2147483647, %v119
    %v122 = vand.u32 2147483647, %v120
    %v123 = vsel %vm50, %v121, -inf
    %124 = vmax.xlane.f32.xlu0 %v123
    %v125 = vpop.xlane.xlu0 %124
    %v126 = vsel %vm50, %v122, -inf
    %127 = vmax.xlane.f32.xlu0 %v126
    %v128 = vpop.xlane.xlu0 %127
    %v129 = vmul.f32 %v125, 0.16666667
    %v130 = vmul.f32 %v128, 0.16666667
    %v131 = vmax.f32 %v129, 1e-12
    %v132 = vmax.f32 %v130, 1e-12
    %v133 = vrcp.pop %v131
    %v134 = vrcp.pop %v132
    %v135 = vmul.f32 %v119, %v133
    %v136 = vmul.f32 %v120, %v134
    %v137 = vmax.f32 %v135, -6.0
    %v138 = vmax.f32 %v136, -6.0
    %v139 = vmin.f32 %v137, 6.0
    %v140 = vmin.f32 %v138, 6.0
    %v141 = vpack.c.bf16 %v139, %v139
    %v142 = vpack.c.bf16 %v140, %v140
    %vm143 = vcmask 125952
    %144 = vst.msk [vmem:[#allocation7] sm:$0xf] %vm143, %v141
    %145 = vst.msk [vmem:[#allocation7 + $0x4] sm:$0xf] %vm143, %v142
    %v146 = vld [vmem:[#allocation2] sm:$0xf]
    %v147 = vld [vmem:[#allocation2 + $0x4] sm:$0xf]
    %v148 = vunpack.c.l.bf16 %v146
    %v149 = vunpack.c.l.bf16 %v147
    %v150 = vmul.f32 %v148, %v103
    %v151 = vmul.f32 %v149, %v113
    %v152 = vld [vmem:[#allocation5] sm:$0x1]
    %v153 = vunpack.c.l.bf16 %v152
    %v154 = vperm.slane %v153, 0
    %v155 = vmul.f32 %v150, %v154
    %v156 = vmul.f32 %v151, %v154
    %v157 = vand.u32 2147483647, %v155
    %v158 = vand.u32 2147483647, %v156
    %vm159 = vcmask 195712
    %v160 = vsel %vm159, %v157, -inf
    %161 = vmax.xlane.f32.xlu0 %v160
    %v162 = vpop.xlane.xlu0 %161
    %v163 = vsel %vm159, %v158, -inf
    %164 = vmax.xlane.f32.xlu0 %v163
    %v165 = vpop.xlane.xlu0 %164
    %v166 = vmul.f32 %v162, 0.035714287
    %v167 = vmul.f32 %v165, 0.035714287
    %v168 = vmax.f32 %v166, 1e-12
    %v169 = vmax.f32 %v167, 1e-12
    %v170 = vrcp.pop %v168
    %v171 = vrcp.pop %v169
    %v172 = vmul.f32 %v155, %v170
    %v173 = vmul.f32 %v156, %v171
    %v174 = vmax.f32 %v172, -28.0
    %v175 = vmax.f32 %v173, -28.0
    %v176 = vmin.f32 %v174, 28.0
    %v177 = vmin.f32 %v175, 28.0
    %v178 = vpack.c.bf16 %v176, %v176
    %v179 = vpack.c.bf16 %v177, %v177
    %vm180 = vcmask 191616
    %181 = vst.msk [vmem:[#allocation7] sm:$0xf] %vm180, %v178
    %182 = vst.msk [vmem:[#allocation7 + $0x4] sm:$0xf] %vm180, %v179
    %v183 = vld [vmem:[#allocation2] sm:$0xf]
    %v184 = vld [vmem:[#allocation2 + $0x4] sm:$0xf]
    %v185 = vunpack.c.l.bf16 %v183
    %v186 = vunpack.c.l.bf16 %v184
    %v187 = vmul.f32 %v185, %v103
    %v188 = vmul.f32 %v186, %v113
    %v189 = vld [vmem:[#allocation5] sm:$0x1]
    %v190 = vunpack.c.l.bf16 %v189
    %v191 = vperm.slane %v190, 0
    %v192 = vmul.f32 %v187, %v191
    %v193 = vmul.f32 %v188, %v191
    %v194 = vand.u32 2147483647, %v192
    %v195 = vand.u32 2147483647, %v193
    %vm196 = vcmask 261312
    %v197 = vsel %vm196, %v194, -inf
    %198 = vmax.xlane.f32.xlu0 %v197
    %v199 = vpop.xlane.xlu0 %198
    %v200 = vsel %vm196, %v195, -inf
    %201 = vmax.xlane.f32.xlu0 %v200
    %v202 = vpop.xlane.xlu0 %201
    %v203 = vmul.f32 %v199, 0.002232143
    %v204 = vmul.f32 %v202, 0.002232143
    %v205 = vmax.f32 %v203, 1e-12
    %v206 = vmax.f32 %v204, 1e-12
    %v207 = vrcp.pop %v205
    %v208 = vrcp.pop %v206
    %v209 = vmul.f32 %v192, %v207
    %v210 = vmul.f32 %v193, %v208
    %v211 = vmax.f32 %v209, -448.0
    %v212 = vmax.f32 %v210, -448.0
    %v213 = vmin.f32 %v211, 448.0
    %v214 = vmin.f32 %v212, 448.0
    %v215 = vpack.c.bf16 %v213, %v213
    %v216 = vpack.c.bf16 %v214, %v214
    %vm217 = vcmask 257216
    %218 = vst.msk [vmem:[#allocation7] sm:$0xf] %vm217, %v215
    %219 = vst.msk [vmem:[#allocation7 + $0x4] sm:$0xf] %vm217, %v216
    %vm220 = vcmask 7168
    %v221 = vsel %vm220, %v131, %v168
    %v222 = vsel %vm220, %v132, %v169
    %vm223 = vcmask 15360
    %v224 = vsel %vm223, %v221, %v205
    %v225 = vsel %vm223, %v222, %v206
    %vm226 = vcmask 23552
    %227 = vst.msk [vmem:[%s3] sm:$0xff] %vm226, %v224
    %228 = vst.msk [vmem:[%s3 + $0x8] sm:$0xff] %vm226, %v225
    // Predicated region
    $region18: #{tpu_custom_call.1} parent=1 // pred_check
      _
    $region19: #{tpu_custom_call.1} parent=1 // pred_check_branch
      %230 = sbr.rel (0) target = $region21
    $region20: #{tpu_custom_call.1} parent=1 // pred_region
      %232 = vsyncadd [#allocation4], 0
      %s233 = sshll.u32 [#allocation7], 4
      %s234 = int_to_ptr.vmem [resolvable:$true] %s233
      %s235 = sshll.u32 %s2, 4
      %s236 = int_to_ptr.hbm [resolvable:$true] %s235
      %241 = dma.vmem_to_hbm [thread:$0]  %s234, 128, %s236, [#allocation4], 64, 64, 4
    $region21: #{tpu_custom_call.1} parent=1 // pred_fallthru
      _
    // Predicated region
    $region22: #{tpu_custom_call.1} parent=1 // pred_check
      _
    $region23: #{tpu_custom_call.1} parent=1 // pred_check_branch
      %243 = sbr.rel (0) target = $region25
    $region24: #{tpu_custom_call.1} parent=1 // pred_region
      _
    $region25: #{tpu_custom_call.1} parent=1 // pred_fallthru
      _
    // Predicated region
    $region26: #{tpu_custom_call.1} parent=1 // pred_check
      _
    $region27: #{tpu_custom_call.1} parent=1 // pred_check_branch
      %245 = sbr.rel (0) target = $region29
    $region28: #{tpu_custom_call.1} parent=1 // pred_region
      %247 = dma.done [#allocation4], 128
    $region29: #{tpu_custom_call.1} parent=1 // pred_fallthru
      _
    // Predicated region
    $region30: #{tpu_custom_call.1} parent=1 // pred_check
      _
    $region31: #{tpu_custom_call.1} parent=1 // pred_check_branch
      %249 = sbr.rel (0) target = $region33
    $region32: #{tpu_custom_call.1} parent=1 // pred_region
      _
    $region33: #{tpu_custom_call.1} parent=1 // pred_fallthru
      _
    %250 = vsyncpa [#allocation3], 1
    %251 = vsyncpa [#allocation6], 1
    %252 = vsyncpa [#allocation4], 1

</llo_original>
